<compile_context>
chip_gen: v6e
topology: v6e:2x2x1
jax: 0.10.0
libtpu: 0.0.40
codegen_flags: <defaults>
</compile_context>

<pallas_src>
import jax
import jax.numpy as jnp
from jax.experimental import pallas as pl
from jax.experimental.pallas import tpu as pltpu


# --------------------------------------------------------------------------
# small helpers
# --------------------------------------------------------------------------
def _round_up(n, m):
    return ((n + m - 1) // m) * m


def _pick_tile(total, preferred):
    """Largest multiple of 128 that divides `total` (itself a multiple of 128)
    and is <= preferred.  Guarantees exact grid division (no ragged blocks)."""
    t = min(total, max(preferred, 128))
    t -= t % 128
    while total % t:
        t -= 128
    return t


def _vmem_limit_bytes():
    """Per-generation VMEM limit: ~75% of physical, leaving headroom for
    Mosaic internal scratch / semaphores (96 MiB on v5e/v6e's 128 MiB,
    48 MiB on v7x's 64 MiB).  Falls back to 48 MiB if the query fails."""
    try:
        cap = int(pltpu.get_tpu_info().vmem_capacity_bytes)
    except Exception:
        cap = 64 * 1024 * 1024
    return max(32 * 1024 * 1024, (cap * 3) // 4)


# --------------------------------------------------------------------------
# kernels
# --------------------------------------------------------------------------
def _dense_kernel(x_ref, w_ref, b_ref, o_ref, acc_ref):
    """out = x @ W + bias, tiled over (batch, N, K) with f32 accumulation.

    x_ref: (tb, tk) native dtype (cast to compute dtype in-kernel)
    w_ref: (tk, tn) compute dtype (W = U[:, :r] S[:r, :r] V[:, :r]^T padded)
    b_ref: (1, tn)  f32
    o_ref: (tb, tn) out dtype
    acc_ref: (tb, tn) f32 scratch
    """
    k = pl.program_id(2)

    @pl.when(k == 0)
    def _():
        acc_ref[...] = jnp.zeros_like(acc_ref)

    acc_ref[...] += jnp.dot(
        x_ref[...].astype(w_ref.dtype), w_ref[...],
        preferred_element_type=jnp.float32)

    @pl.when(k == pl.num_programs(2) - 1)
    def _():
        o_ref[...] = (acc_ref[...] + b_ref[...]).astype(o_ref.dtype)


def _lowrank_kernel(x_ref, w1_ref, vt_ref, b_ref, o_ref, acc_ref):
    """out = (x @ W1) @ Vr^T + bias, tiled over (batch, K).

    x_ref:  (tb, tk)          native dtype (cast in-kernel)
    w1_ref: (tk, r_pad)       compute dtype (W1 = U[:, :r] @ S[:r, :r], padded)
    vt_ref: (r_pad, out_pad)  compute dtype (V[:, :r].T, padded, grid-invariant)
    b_ref:  (1, out_pad)      f32           (grid-invariant)
    o_ref:  (tb, out_pad)     out dtype
    acc_ref:(tb, r_pad)       f32 scratch  (accumulates x @ W1 across K tiles)
    """
    k = pl.program_id(1)

    @pl.when(k == 0)
    def _():
        acc_ref[...] = jnp.zeros_like(acc_ref)

    acc_ref[...] += jnp.dot(
        x_ref[...].astype(w1_ref.dtype), w1_ref[...],
        preferred_element_type=jnp.float32)

    @pl.when(k == pl.num_programs(1) - 1)
    def _():
        # Single cast of the small (tb, r_pad) intermediate; accumulation
        # across K tiles stays f32 for correctness.
        xw = acc_ref[...].astype(vt_ref.dtype)
        out = jnp.dot(xw, vt_ref[...], preferred_element_type=jnp.float32)
        o_ref[...] = (out + b_ref[...]).astype(o_ref.dtype)


# --------------------------------------------------------------------------
# pallas_call wrappers (one per path)
# --------------------------------------------------------------------------
def _dense_path_call(xp, w, bias_p, *, tb, tn, tk, out_dtype, vmem_limit):
    Bp, in_pad = xp.shape
    out_pad = w.shape[1]
    grid = (Bp // tb, out_pad // tn, in_pad // tk)
    return pl.pallas_call(
        _dense_kernel,
        out_shape=jax.ShapeDtypeStruct((Bp, out_pad), out_dtype),
        grid_spec=pltpu.PrefetchScalarGridSpec(
            num_scalar_prefetch=0,
            grid=grid,
            in_specs=[
                pl.BlockSpec((tb, tk), lambda i, j, k: (i, k)),
                pl.BlockSpec((tk, tn), lambda i, j, k: (k, j)),
                pl.BlockSpec((1, tn), lambda i, j, k: (0, j)),
            ],
            out_specs=pl.BlockSpec((tb, tn), lambda i, j, k: (i, j)),
            scratch_shapes=[pltpu.VMEM((tb, tn), jnp.float32)],
        ),
        compiler_params=pltpu.CompilerParams(
            dimension_semantics=("parallel", "parallel", "arbitrary"),
            vmem_limit_bytes=vmem_limit,
        ),
    )(xp, w, bias_p)


def _lowrank_path_call(xp, w1, vt, bias_p, *, tb, tk, out_dtype, vmem_limit):
    Bp, in_pad = xp.shape
    r_pad = w1.shape[1]
    out_pad = vt.shape[1]
    grid = (Bp // tb, in_pad // tk)

    def build(single_buffer_invariants):
        if single_buffer_invariants:
            # Grid-invariant operands: one pipeline buffer is enough; the
            # default second buffer would be dead VMEM.
            def inv_spec(shape, imap):
                return pl.BlockSpec(shape, imap, pipeline_mode=pl.Buffered(1))
        else:
            def inv_spec(shape, imap):
                return pl.BlockSpec(shape, imap)
        return pl.pallas_call(
            _lowrank_kernel,
            out_shape=jax.ShapeDtypeStruct((Bp, out_pad), out_dtype),
            grid_spec=pltpu.PrefetchScalarGridSpec(
                num_scalar_prefetch=0,
                grid=grid,
                in_specs=[
                    pl.BlockSpec((tb, tk), lambda i, k: (i, k)),
                    pl.BlockSpec((tk, r_pad), lambda i, k: (k, 0)),
                    inv_spec((r_pad, out_pad), lambda i, k: (0, 0)),
                    inv_spec((1, out_pad), lambda i, k: (0, 0)),
                ],
                out_specs=pl.BlockSpec((tb, out_pad), lambda i, k: (i, 0)),
                scratch_shapes=[pltpu.VMEM((tb, r_pad), jnp.float32)],
            ),
            compiler_params=pltpu.CompilerParams(
                dimension_semantics=("parallel", "arbitrary"),
                vmem_limit_bytes=vmem_limit,
            ),
        )

    try:
        return build(True)(xp, w1, vt, bias_p)
    except Exception:
        # pipeline_mode / Buffered(1) unsupported on this JAX: fall back to the
        # default double-buffered specs (correct, slightly more VMEM).
        return build(False)(xp, w1, vt, bias_p)


# --------------------------------------------------------------------------
# public API
# --------------------------------------------------------------------------
def prepare_lowrank_weights(U, S, V, bias, *, r, compute_dtype=jnp.bfloat16):
    """Fold S into U, transpose V, pad & cast weights ONCE.

    Call this once per weight update and cache the result; `lowrank_apply`
    then only streams x (no per-call weight matmul / pad / cast HBM passes).
    Returns (weights, bias_f32) where weights is a 1-tuple (dense fast path)
    or 2-tuple (low-rank path) of padded compute-dtype matrices.
    """
    input_size = U.shape[0]
    output_size = V.shape[0]
    in_pad = _round_up(input_size, 128)
    r_pad = _round_up(max(int(r), 1), 128)
    out_pad = _round_up(output_size, 128)

    W1 = U[:, :r] @ S[:r, :r]                       # (input_size, r), f32

    if r_pad * (in_pad + out_pad) >= in_pad * out_pad:
        # Padded rank erases the low-rank FLOP/byte savings -> collapse to one
        # dense matmul (half the MXU passes and weight DMA of the 2-dot path).
        W = W1 @ V[:, :r].T                         # (input_size, output_size)
        Wp = jnp.zeros((in_pad, out_pad), compute_dtype).at[
            :input_size, :output_size].set(W.astype(compute_dtype))
        weights = (Wp,)
    else:
        W1p = jnp.zeros((in_pad, r_pad), compute_dtype).at[
            :input_size, :r].set(W1.astype(compute_dtype))
        VTp = jnp.zeros((r_pad, out_pad), compute_dtype).at[
            :r, :output_size].set(V[:, :r].T.astype(compute_dtype))
        weights = (W1p, VTp)

    return weights, bias.astype(jnp.float32)


def lowrank_apply(x, weights, bias, *, tile_b=512, out_dtype=None):
    """Apply a prepared LowRankLayer to x.  x is only padded/copied when its
    shape actually requires it; dtype casts happen inside the kernel."""
    B, input_size = x.shape
    output_size = bias.shape[0]
    in_pad = weights[0].shape[0]
    out_pad = weights[-1].shape[-1]
    out_dtype = x.dtype if out_dtype is None else jnp.dtype(out_dtype)
    vmem_limit = _vmem_limit_bytes()
    budget = int(0.7 * vmem_limit)

    x_item = jnp.dtype(x.dtype).itemsize
    o_item = jnp.dtype(out_dtype).itemsize
    c_item = jnp.dtype(weights[0].dtype).itemsize

    # ---- batch tile: multiple of 16, up to tile_b, >=2 grid steps when the
    # batch allows it so v7x can shard the axis over its 2 TensorCores.
    tb = _round_up(min(int(tile_b), _round_up(B, 16)), 16)
    if B > 16:
        tb = min(tb, _round_up(-(-B // 2), 16))

    dense = len(weights) == 1
    if dense:
        (w,) = weights
        tn = _pick_tile(out_pad, 512)
        tk = _pick_tile(in_pad, 1024)

        def est(tb_):
            return (2 * tb_ * tk * x_item + 2 * tk * tn * c_item + 2 * tn * 4
                    + 2 * tb_ * tn * o_item + tb_ * tn * 4)
    else:
        w1, vt = weights
        r_pad = w1.shape[1]
        tk = _pick_tile(in_pad, 1024)

        def est(tb_):
            return (2 * tb_ * tk * x_item + 2 * tk * r_pad * c_item
                    + r_pad * out_pad * c_item + out_pad * 4
                    + 2 * tb_ * out_pad * o_item + tb_ * r_pad * 4)

    # Shrink the batch tile until the residency estimate fits the VMEM budget.
    while tb > 16 and est(tb) > budget:
        tb = max(16, (tb // 2 // 16) * 16)
    # TODO(synk): for extremely large output_size on v7x, add an explicit N
    # grid axis to the low-rank path instead of only shrinking tb.

    Bp = _round_up(B, tb)

    # Pad x only when actually needed (common case input_size % 128 == 0 and
    # B % tb == 0: x streams straight from HBM; bf16 cast happens in-kernel).
    if Bp != B or in_pad != input_size:
        xp = jnp.pad(x, ((0, Bp - B), (0, in_pad - input_size)))
    else:
        xp = x

    if out_pad == output_size:
        bias_p = bias.astype(jnp.float32).reshape(1, out_pad)
    else:
        bias_p = jnp.zeros((1, out_pad), jnp.float32).at[0, :output_size].set(
            bias.astype(jnp.float32))

    if dense:
        out = _dense_path_call(xp, w, bias_p, tb=tb, tn=tn, tk=tk,
                               out_dtype=out_dtype, vmem_limit=vmem_limit)
    else:
        out = _lowrank_path_call(xp, w1, vt, bias_p, tb=tb, tk=tk,
                                 out_dtype=out_dtype, vmem_limit=vmem_limit)

    # Slice only when padding was actually needed (avoids an extra HBM pass).
    if Bp != B or out_pad != output_size:
        out = out[:B, :output_size]
    return out


def lowrank_forward(x, U, S, V, bias, *, r, tile_b=512,
                    compute_dtype=jnp.bfloat16, out_dtype=None):
    """One-shot forward (prepare + apply).  For repeated inference, call
    prepare_lowrank_weights once per weight update and reuse its result."""
    weights, bias_f32 = prepare_lowrank_weights(
        U, S, V, bias, r=r, compute_dtype=compute_dtype)
    return lowrank_apply(x, weights, bias_f32, tile_b=tile_b, out_dtype=out_dtype)


def init_lowrank_params(key, input_size, output_size, rank, adaptive=True):
    """Deterministic synthetic init matching LowRankLayer.__init__ shapes."""
    r1 = 2 * rank if adaptive else rank
    k_u, k_s, k_v, k_b = jax.random.split(key, 4)
    U = jax.random.normal(k_u, (input_size, r1), dtype=jnp.float32)
    S = jax.random.normal(k_s, (r1, r1), dtype=jnp.float32)
    V = jax.random.normal(k_v, (output_size, r1), dtype=jnp.float32)
    U, _ = jnp.linalg.qr(U, mode="reduced")     # torch.linalg.qr(..., 'reduced')
    V, _ = jnp.linalg.qr(V, mode="reduced")
    bias = jax.random.normal(k_b, (output_size,), dtype=jnp.float32)
    return U, S, V, bias


# TODO(synk): the training-time methods (step / BiasStep / Truncate: QR, SVD,
# rank adaptation) are host-side optimizer logic, not part of forward; they are
# intentionally not translated to Pallas.

if __name__ == "__main__":
    key = jax.random.PRNGKey(0)

    def run_case(name, batch, input_size, output_size, rank, init_compression, k):
        r = int(init_compression * rank)
        k_x, k_p = jax.random.split(k)
        x = jax.random.normal(k_x, (batch, input_size), dtype=jnp.float32)
        U, S, V, bias = init_lowrank_params(k_p, input_size, output_size, rank,
                                            adaptive=True)
        # Hoisted weight prep (cacheable across calls), then apply.
        weights, bias_f32 = prepare_lowrank_weights(U, S, V, bias, r=r)
        out = lowrank_apply(x, weights, bias_f32)
        out = jax.block_until_ready(out)

        # Pure-JAX f32 reference (kernel uses bf16 MXU operands with f32
        # accumulation -> moderate tolerance).
        ref = (x @ U[:, :r]) @ S[:r, :r] @ V[:, :r].T + bias
        assert out.shape == (batch, output_size), f"{name}: bad shape {out.shape}"
        assert out.dtype == x.dtype, f"{name}: bad dtype {out.dtype}"
        assert jnp.allclose(out, ref, atol=5e-2, rtol=5e-2), f"{name}: mismatch"

    k1, k2 = jax.random.split(key)
    # Small case (module defaults): padded rank makes the dense single-matmul
    # fast path optimal (r=4, in/out pad to 128).
    run_case("dense_path", batch=8, input_size=32, output_size=64,
             rank=8, init_compression=0.5, k=k1)
    # Case that keeps the two-matmul low-rank path and exercises batch tiling
    # (>=2 grid steps) and K tiling with the f32 accumulator.
    run_case("lowrank_path", batch=24, input_size=1280, output_size=384,
             rank=8, init_compression=0.5, k=k2)

    print("KERNEL_OK")
</pallas_src>

<mosaic_0001>
module attributes {stable_mosaic.version = 11 : i64} {
  func.func @_dense_kernel(%arg0: i32, %arg1: i32, %arg2: i32, %arg3: memref<16x128xf32, #tpu.memory_space<vmem>>, %arg4: memref<128x128xbf16, #tpu.memory_space<vmem>>, %arg5: memref<1x128xf32, #tpu.memory_space<vmem>>, %arg6: memref<16x128xf32, #tpu.memory_space<vmem>>, %arg7: memref<16x128xf32, #tpu.memory_space<vmem>>) attributes {dimension_semantics = [#tpu.dimension_semantics<parallel>, #tpu.dimension_semantics<parallel>, #tpu.dimension_semantics<arbitrary>], iteration_bounds = array<i64: 1, 1, 1>, scalar_prefetch = 0 : i64, scratch_operands = 1 : i64, tpu.core_type = #tpu.core_type<tc>, window_params = [{transform_indices = @transform_0, window_bounds = array<i64: 16, 128>}, {transform_indices = @transform_1, window_bounds = array<i64: 128, 128>}, {transform_indices = @transform_2, window_bounds = array<i64: 1, 128>}, {transform_indices = @transform_3, window_bounds = array<i64: 16, 128>}]} {
    %c0_i32 = arith.constant 0 : i32
    %0 = arith.cmpi eq, %arg2, %c0_i32 : i32
    %1 = arith.extui %0 : i1 to i32
    %c0_i32_0 = arith.constant 0 : i32
    %2 = arith.cmpi ne, %1, %c0_i32_0 : i32
    scf.if %2 {
      %cst_10 = arith.constant 0.000000e+00 : f32
      %13 = vector.broadcast %cst_10 : f32 to vector<16x128xf32>
      %c0_11 = arith.constant 0 : index
      %c0_12 = arith.constant 0 : index
      %14 = vector.load %arg7[%c0_11, %c0_12] : memref<16x128xf32, #tpu.memory_space<vmem>>, vector<16x128xf32>
      tpu.vector_store %arg7[%c0_11, %c0_12], %13 {strides = array<i32>} : memref<16x128xf32, #tpu.memory_space<vmem>>, vector<16x128xf32>,
    } else {
    }
    %c0 = arith.constant 0 : index
    %c0_1 = arith.constant 0 : index
    %3 = vector.load %arg7[%c0, %c0_1] : memref<16x128xf32, #tpu.memory_space<vmem>>, vector<16x128xf32>
    %c0_2 = arith.constant 0 : index
    %c0_3 = arith.constant 0 : index
    %4 = vector.load %arg3[%c0_2, %c0_3] : memref<16x128xf32, #tpu.memory_space<vmem>>, vector<16x128xf32>
    %5 = arith.truncf %4 : vector<16x128xf32> to vector<16x128xbf16>
    %c0_4 = arith.constant 0 : index
    %c0_5 = arith.constant 0 : index
    %6 = vector.load %arg4[%c0_4, %c0_5] : memref<128x128xbf16, #tpu.memory_space<vmem>>, vector<128x128xbf16>
    %cst = arith.constant dense<0.000000e+00> : vector<16x128xf32>
    %7 = tpu.matmul %5, %6, %cst {dimension_numbers = #tpu.dot_dimension_numbers<[1], [0], [0], [1], [0, 0, 1, 1], [], []>} : vector<16x128xbf16>, vector<128x128xbf16>, vector<16x128xf32> -> vector<16x128xf32>
    %8 = arith.addf %3, %7 : vector<16x128xf32>
    %c0_6 = arith.constant 0 : index
    %c0_7 = arith.constant 0 : index
    %9 = vector.load %arg7[%c0_6, %c0_7] : memref<16x128xf32, #tpu.memory_space<vmem>>, vector<16x128xf32>
    tpu.vector_store %arg7[%c0_6, %c0_7], %8 {strides = array<i32>} : memref<16x128xf32, #tpu.memory_space<vmem>>, vector<16x128xf32>,
    %c0_i32_8 = arith.constant 0 : i32
    %10 = arith.cmpi eq, %arg2, %c0_i32_8 : i32
    %11 = arith.extui %10 : i1 to i32
    %c0_i32_9 = arith.constant 0 : i32
    %12 = arith.cmpi ne, %11, %c0_i32_9 : i32
    scf.if %12 {
      %c0_10 = arith.constant 0 : index
      %c0_11 = arith.constant 0 : index
      %13 = vector.load %arg7[%c0_10, %c0_11] : memref<16x128xf32, #tpu.memory_space<vmem>>, vector<16x128xf32>
      %c0_12 = arith.constant 0 : index
      %c0_13 = arith.constant 0 : index
      %14 = vector.load %arg5[%c0_12, %c0_13] : memref<1x128xf32, #tpu.memory_space<vmem>>, vector<1x128xf32>
      %15 = vector.broadcast %14 : vector<1x128xf32> to vector<16x128xf32>
      %16 = arith.addf %13, %15 : vector<16x128xf32>
      %c0_14 = arith.constant 0 : index
      %c0_15 = arith.constant 0 : index
      %17 = vector.load %arg6[%c0_14, %c0_15] : memref<16x128xf32, #tpu.memory_space<vmem>>, vector<16x128xf32>
      tpu.vector_store %arg6[%c0_14, %c0_15], %16 {strides = array<i32>} : memref<16x128xf32, #tpu.memory_space<vmem>>, vector<16x128xf32>,
    } else {
    }
    return
  }
  func.func @transform_0(%arg0: i32, %arg1: i32, %arg2: i32) -> (i32, i32) {
    %c0_i32 = arith.constant 0 : i32
    return %arg0, %arg2 : i32, i32
  }
  func.func @transform_1(%arg0: i32, %arg1: i32, %arg2: i32) -> (i32, i32) {
    %c0_i32 = arith.constant 0 : i32
    return %arg2, %arg1 : i32, i32
  }
  func.func @transform_2(%arg0: i32, %arg1: i32, %arg2: i32) -> (i32, i32) {
    %c0_i32 = arith.constant 0 : i32
    %c0_i32_0 = arith.constant 0 : i32
    return %c0_i32, %arg1 : i32, i32
  }
  func.func @transform_3(%arg0: i32, %arg1: i32, %arg2: i32) -> (i32, i32) {
    %c0_i32 = arith.constant 0 : i32
    return %arg0, %arg1 : i32, i32
  }
}

</mosaic_0001>

<llo_original>
// kernel: tpu_custom_call.1
$region0: #{tpu_custom_call.1}
  #allocation0 [shape = 'u32[]', space=smem, size = 0x4, offset = 0x4, fixed_abs, tag = 'smem constant byte address 0x4 - core index']
  #allocation1 [shape = 'u32[144,128]{1,0:T(1,128)}', space=vmem, size = 0x12000, scoped, tag = 'internal scratch']
  #allocation2 [shape = 'f32[16,128]{1,0:T(8,128)}', space=vmem, size = 0x2000, scoped, tag = 'scratch operand']
  %s0 = inlined_call_operand.hbm [shape: f32[16,128], index: 0, kind: input, shape index: {}]
  %s1 = inlined_call_operand.hbm [shape: bf16[128,128], index: 1, kind: input, shape index: {}]
  %s2 = inlined_call_operand.vmem [shape: f32[1,128], index: 2, kind: input, shape index: {}]
  %s3 = inlined_call_operand.hbm [shape: f32[16,128], index: 3, kind: output, shape index: {}]
  %s4 = sld [smem:[#allocation0]]
  $region38: #{tpu_custom_call.1} parent=0
    _
  %s6 = ssub.s32 1, %s4
  %s7 = scalar_select 0, %s6, %s4
  $region1: #{tpu_custom_call.1} parent=0
    #allocation3 [shape = 'u8[8192]{0}', space=vmem, size = 0x2000, scoped, tag = 'input window, operand 0, single buffered']
    #allocation4 [shape = 's32[1]{0}', space=sflag, size = 0x4, scoped, tag = 'scoped memory for tpu_custom_call.1']
    #allocation5 [shape = 's32[1]{0}', space=sflag, size = 0x4, scoped, tag = 'scoped memory for tpu_custom_call.1']
    #allocation6 [shape = 'u8[32768]{0}', space=vmem, size = 0x8000, scoped, tag = 'input window, operand 1, single buffered']
    #allocation7 [shape = 's32[1]{0}', space=sflag, size = 0x4, scoped, tag = 'scoped memory for tpu_custom_call.1']
    #allocation8 [shape = 'u8[8192]{0}', space=vmem, size = 0x2000, scoped, tag = 'output window, operand 0, single buffered']
    %8 = vsyncpa [#allocation4], 0
    %9 = vsyncpa [#allocation7], 0
    %10 = vsyncpa [#allocation5], 0
    // Predicated region
    $region2: #{tpu_custom_call.1} parent=1 // pred_check
      _
    $region3: #{tpu_custom_call.1} parent=1 // pred_check_branch
      %12 = sbr.rel (0) target = $region5
    $region4: #{tpu_custom_call.1} parent=1 // pred_region
      %s14 = ssub.s32 256, 256
      %15 = vsyncadd [#allocation4], %s14
      %s16 = sshll.u32 [#allocation3], 4
      %s17 = int_to_ptr.vmem [resolvable:$true] %s16
      %22 = dma.hbm_to_vmem [thread:$0]  %s0, 256, %s17, [#allocation4], 128, 128, 8
    $region5: #{tpu_custom_call.1} parent=1 // pred_fallthru
      _
    // Predicated region
    $region6: #{tpu_custom_call.1} parent=1 // pred_check
      _
    $region7: #{tpu_custom_call.1} parent=1 // pred_check_branch
      %24 = sbr.rel (0) target = $region9
    $region8: #{tpu_custom_call.1} parent=1 // pred_region
      %s26 = ssub.s32 1024, 1024
      %27 = vsyncadd [#allocation7], %s26
      %s28 = sshll.u32 [#allocation6], 4
      %s29 = int_to_ptr.vmem [resolvable:$true] %s28
      %34 = dma.hbm_to_vmem [thread:$0]  %s1, 1024, %s29, [#allocation7], 64, 64, 4
    $region9: #{tpu_custom_call.1} parent=1 // pred_fallthru
      _
    // Predicated region
    $region10: #{tpu_custom_call.1} parent=1 // pred_check
      _
    $region11: #{tpu_custom_call.1} parent=1 // pred_check_branch
      %36 = sbr.rel (0) target = $region13
    $region12: #{tpu_custom_call.1} parent=1 // pred_region
      _
    $region13: #{tpu_custom_call.1} parent=1 // pred_fallthru
      _
    // Predicated region
    $region14: #{tpu_custom_call.1} parent=1 // pred_check
      _
    $region15: #{tpu_custom_call.1} parent=1 // pred_check_branch
      %38 = sbr.rel (0) target = $region17
    $region16: #{tpu_custom_call.1} parent=1 // pred_region
      %39 = dma.done [#allocation4], 256
    $region17: #{tpu_custom_call.1} parent=1 // pred_fallthru
      _
    // Predicated region
    $region18: #{tpu_custom_call.1} parent=1 // pred_check
      _
    $region19: #{tpu_custom_call.1} parent=1 // pred_check_branch
      %41 = sbr.rel (0) target = $region21
    $region20: #{tpu_custom_call.1} parent=1 // pred_region
      %42 = dma.done [#allocation7], 1024
    $region21: #{tpu_custom_call.1} parent=1 // pred_fallthru
      _
    %p44 = scmp.eq.s32.totalorder 0, 0
    // Predicated region
    $region22: #{tpu_custom_call.1} parent=1 // pred_check
      %p45 = pneg %p44
    $region23: #{tpu_custom_call.1} parent=1 // pred_check_branch
      %47 = sbr.rel (%p45) target = $region25
    $region24: #{tpu_custom_call.1} parent=1 // pred_region
      %48 = vst [vmem:[#allocation2] sm:$0xff] 0.0
      %49 = vst [vmem:[#allocation2 + $0x8] sm:$0xff] 0.0
    $region25: #{tpu_custom_call.1} parent=1 // pred_fallthru
      _
    %v50 = vld [vmem:[#allocation2] sm:$0xff]
    %v51 = vld [vmem:[#allocation2 + $0x8] sm:$0xff]
    %v52 = vld [vmem:[#allocation3] sm:$0xff]
    %v53 = vld [vmem:[#allocation3 + $0x8] sm:$0xff]
    %v54 = vpack.c.bf16 %v53, %v52
    %v55 = vld [vmem:[#allocation6] sm:$0xf]
    %v56 = vld [vmem:[#allocation6 + $0x4] sm:$0xf]
    %v57 = vld [vmem:[#allocation6 + $0x8] sm:$0xf]
    %v58 = vld [vmem:[#allocation6 + $0xc] sm:$0xf]
    %v59 = vld [vmem:[#allocation6 + $0x10] sm:$0xf]
    %v60 = vld [vmem:[#allocation6 + $0x14] sm:$0xf]
    %v61 = vld [vmem:[#allocation6 + $0x18] sm:$0xf]
    %v62 = vld [vmem:[#allocation6 + $0x1c] sm:$0xf]
    %v63 = vld [vmem:[#allocation6 + $0x20] sm:$0xf]
    %v64 = vld [vmem:[#allocation6 + $0x24] sm:$0xf]
    %v65 = vld [vmem:[#allocation6 + $0x28] sm:$0xf]
    %v66 = vld [vmem:[#allocation6 + $0x2c] sm:$0xf]
    %v67 = vld [vmem:[#allocation6 + $0x30] sm:$0xf]
    %v68 = vld [vmem:[#allocation6 + $0x34] sm:$0xf]
    %v69 = vld [vmem:[#allocation6 + $0x38] sm:$0xf]
    %v70 = vld [vmem:[#allocation6 + $0x3c] sm:$0xf]
    %v87 = vunpack.c.l.b16 %v55
    %v88 = vunpack.c.l.b16 %v56
    %v89 = vunpack.c.l.b16 %v57
    %v90 = vunpack.c.l.b16 %v58
    %v91 = vunpack.c.l.b16 %v59
    %v92 = vunpack.c.l.b16 %v60
    %v93 = vunpack.c.l.b16 %v61
    %v94 = vunpack.c.l.b16 %v62
    %v95 = vunpack.c.l.b16 %v63
    %v96 = vunpack.c.l.b16 %v64
    %v97 = vunpack.c.l.b16 %v65
    %v98 = vunpack.c.l.b16 %v66
    %v99 = vunpack.c.l.b16 %v67
    %v100 = vunpack.c.l.b16 %v68
    %v101 = vunpack.c.l.b16 %v69
    %v102 = vunpack.c.l.b16 %v70
    %v103 = vpack.c.b16 %v88, %v87
    %v104 = vpack.c.b16 %v90, %v89
    %v105 = vpack.c.b16 %v92, %v91
    %v106 = vpack.c.b16 %v94, %v93
    %v107 = vpack.c.b16 %v96, %v95
    %v108 = vpack.c.b16 %v98, %v97
    %v109 = vpack.c.b16 %v100, %v99
    %v110 = vpack.c.b16 %v102, %v101
    %119 = vmatprep.subr.bf16.mxu0 0
    %120 = vmatpush1.bf16.msra.mxu0 %v110
    %121 = vmatprep.subr.bf16.mxu0 0
    %122 = vmatpush1.bf16.msra.mxu0 %v109
    %123 = vmatprep.subr.bf16.mxu0 0
    %124 = vmatpush1.bf16.msra.mxu0 %v108
    %125 = vmatprep.subr.bf16.mxu0 0
    %126 = vmatpush1.bf16.msra.mxu0 %v107
    %127 = vmatprep.subr.bf16.mxu0 0
    %128 = vmatpush1.bf16.msra.mxu0 %v106
    %129 = vmatprep.subr.bf16.mxu0 0
    %130 = vmatpush1.bf16.msra.mxu0 %v105
    %131 = vmatprep.subr.bf16.mxu0 0
    %132 = vmatpush1.bf16.msra.mxu0 %v104
    %133 = vmatprep.subr.bf16.mxu0 0
    %134 = vmatpush1.bf16.msra.mxu0 %v103
    %135 = vmatprep.subr.bf16.mxu0 0
    %136 = vmatpush2.bf16.msra.mxu0 0
    %137 = vmatprep.subr.bf16.mxu0 0
    %138 = vmatpush2.bf16.msra.mxu0 0
    %139 = vmatprep.subr.bf16.mxu0 0
    %140 = vmatpush2.bf16.msra.mxu0 0
    %141 = vmatprep.subr.bf16.mxu0 0
    %142 = vmatpush2.bf16.msra.mxu0 0
    %143 = vmatprep.subr.bf16.mxu0 0
    %144 = vmatpush2.bf16.msra.mxu0 0
    %145 = vmatprep.subr.bf16.mxu0 0
    %146 = vmatpush2.bf16.msra.mxu0 0
    %147 = vmatprep.subr.bf16.mxu0 0
    %148 = vmatpush2.bf16.msra.mxu0 0
    %149 = vmatprep.subr.bf16.mxu0 0
    %150 = vmatpush2.bf16.msra.mxu0 0
    %151 = vmatprep.mubr.bf16.mxu0 0
    %152 = vmatmul.mubr.bf16.gmra.mxu0 %v54
    %v153 = vpop.f32.mrf.mxu0
    %v154 = vadd.f32 0.0, %v153
    %v155 = vpop.f32.mrf.mxu0
    %v156 = vpop.f32.mrf.mxu0
    %v157 = vadd.f32 0.0, %v156
    %v158 = vpop.f32.mrf.mxu0
    %159 = vdwg.mxu0
    %v160 = vadd.f32 %v50, %v154
    %v161 = vadd.f32 %v51, %v157
    %162 = vst [vmem:[#allocation2] sm:$0xff] %v160
    %163 = vst [vmem:[#allocation2 + $0x8] sm:$0xff] %v161
    // Predicated region
    $region26: #{tpu_custom_call.1} parent=1 // pred_check
      %p164 = pneg %p44
    $region27: #{tpu_custom_call.1} parent=1 // pred_check_branch
      %166 = sbr.rel (%p164) target = $region29
    $region28: #{tpu_custom_call.1} parent=1 // pred_region
      %v167 = vld [vmem:[#allocation2] sm:$0xff]
      %v168 = vld [vmem:[#allocation2 + $0x8] sm:$0xff]
      %v169 = vld [vmem:[%s2] sm:$0x1]
      %v171 = vlaneseq
      %v172 = vshrl.u32 %v171, 7
      %v173 = vsub.s32 0, %v172
      %v174 = vrot.slane %v169, %v173
      %v176 = vadd.f32 %v167, %v174
      %v177 = vadd.f32 %v168, %v174
      %178 = vst [vmem:[#allocation8] sm:$0xff] %v176
      %179 = vst [vmem:[#allocation8 + $0x8] sm:$0xff] %v177
    $region29: #{tpu_custom_call.1} parent=1 // pred_fallthru
      _
    // Predicated region
    $region30: #{tpu_custom_call.1} parent=1 // pred_check
      _
    $region31: #{tpu_custom_call.1} parent=1 // pred_check_branch
      %181 = sbr.rel (0) target = $region33
    $region32: #{tpu_custom_call.1} parent=1 // pred_region
      %s183 = ssub.s32 256, 256
      %184 = vsyncadd [#allocation5], %s183
      %s185 = sshll.u32 [#allocation8], 4
      %s186 = int_to_ptr.vmem [resolvable:$true] %s185
      %191 = dma.vmem_to_hbm [thread:$0]  %s186, 256, %s3, [#allocation5], 128, 128, 8
    $region33: #{tpu_custom_call.1} parent=1 // pred_fallthru
      _
    // Predicated region
    $region34: #{tpu_custom_call.1} parent=1 // pred_check
      _
    $region35: #{tpu_custom_call.1} parent=1 // pred_check_branch
      %193 = sbr.rel (0) target = $region37
    $region36: #{tpu_custom_call.1} parent=1 // pred_region
      %194 = dma.done [#allocation5], 256
    $region37: #{tpu_custom_call.1} parent=1 // pred_fallthru
      _
    %195 = vsyncpa [#allocation4], 1
    %196 = vsyncpa [#allocation7], 1
    %197 = vsyncpa [#allocation5], 1

</llo_original>
